<compile_context>
chip_gen: v6e
topology: v6e:2x2x1
jax: 0.10.0
libtpu: 0.0.40
codegen_flags: <defaults>
</compile_context>

<pallas_src>
import functools

import jax
import jax.numpy as jnp
from jax.experimental import pallas as pl
from jax.experimental.pallas import tpu as pltpu


# ----------------------------- Pallas kernel ------------------------------ #

def _autoenc_fused_kernel(*refs, n_enc: int, n_dec: int):
    """refs = (x, w0, b0, w1, b1, ..., enc_out, dec_out).

    Chains every Linear (+ Sigmoid where the module has one) with all
    intermediate activations kept on-chip.  Encoder output is written to
    enc_out (no activation on the last encoder layer, matching the module),
    decoder output to dec_out.
    """
    n_layers = n_enc + n_dec
    x_ref = refs[0]
    wb_refs = refs[1:1 + 2 * n_layers]
    enc_ref, dec_ref = refs[1 + 2 * n_layers:]

    h = x_ref[...].astype(jnp.float32)
    for i in range(n_layers):
        w = wb_refs[2 * i][...]            # bf16 weights (stored bf16 in HBM)
        b = wb_refs[2 * i + 1][...]        # f32 bias, shape (1, dout)
        # bf16 operands feed the bf16-native MXU (v6e/v7x; also fine on v5e's
        # 4x128 MXU); accumulate and bias-add in f32.
        y = jnp.dot(h.astype(jnp.bfloat16), w.astype(jnp.bfloat16),
                    preferred_element_type=jnp.float32) + b
        if i == n_enc - 1:
            # Last encoder layer: no activation; this IS the encoded output,
            # and it feeds the decoder unactivated (matches nn.Sequential).
            enc_ref[...] = y.astype(enc_ref.dtype)
            h = y
        elif i == n_layers - 1:
            # Last decoder layer: no activation.
            dec_ref[...] = y.astype(dec_ref.dtype)
        else:
            # Hidden layer: Sigmoid on the f32 EUP path (safe on v5e/v6e/v7x).
            h = jax.nn.sigmoid(y)


def _pick_batch_tile(B: int) -> int:
    """Batch tile: >=2 grid steps when possible (v7x dual-TC), <=512 rows."""
    if B < 16:
        return B                      # single tile; can't keep >=8 sublanes if split
    tb = min(512, pl.cdiv(B, 2))      # at least 2 tiles, cap at 512 rows
    return ((tb + 7) // 8) * 8        # sublane-aligned


def autoenc_forward_fused(params, x):
    """Single fused pallas_call for the whole AutoEnc forward.

    Returns (encoded, decoded), same semantics as the PyTorch module.
    """
    enc_layers = list(params["encoder"])
    dec_layers = list(params["decoder"])
    layers = enc_layers + dec_layers
    n_enc, n_dec = len(enc_layers), len(dec_layers)

    B, Din = x.shape
    d_encoded = enc_layers[-1][0].shape[1]
    d_decoded = dec_layers[-1][0].shape[1]
    out_dtype = x.dtype

    # ---- batch tiling (robust to arbitrary B via zero-padding) ----
    TB = _pick_batch_tile(B)
    n_tiles = pl.cdiv(B, TB)
    B_pad = n_tiles * TB
    x_in = x if B_pad == B else jnp.pad(x, ((0, B_pad - B), (0, 0)))

    # ---- flat operand list: x, then (w, b) per layer ----
    operands = [x_in]
    in_specs = [pl.BlockSpec((TB, Din), lambda i: (i, 0), memory_space=pltpu.VMEM)]
    flops = 0
    transcendentals = 0
    wb_bytes = 0
    bytes_accessed = x_in.size * x_in.dtype.itemsize
    for li, (w, b) in enumerate(layers):
        din, dout = w.shape
        operands += [w, b]
        # Weights/biases: constant index_map -> same block for every batch
        # tile, so they stay resident in VMEM across the grid.
        in_specs += [
            pl.BlockSpec((din, dout), lambda i: (0, 0), memory_space=pltpu.VMEM),
            pl.BlockSpec((1, dout), lambda i: (0, 0), memory_space=pltpu.VMEM),
        ]
        flops += 2 * B_pad * din * dout
        wb_bytes += w.size * w.dtype.itemsize + b.size * b.dtype.itemsize
        if li != n_enc - 1 and li != n_enc + n_dec - 1:
            transcendentals += B_pad * dout
    out_bytes = B_pad * (d_encoded + d_decoded) * out_dtype.itemsize
    bytes_accessed += wb_bytes + out_bytes

    # VMEM budget: double-buffered x tile + double-buffered output tiles +
    # (conservatively double-buffered) weights.  Clamp to [32 MiB, 64 MiB] so
    # the explicit limit is valid on v7x (64 MiB physical) and v5e/v6e.
    vmem_needed = (2 * TB * Din * x_in.dtype.itemsize
                   + 2 * TB * (d_encoded + d_decoded) * out_dtype.itemsize
                   + 2 * wb_bytes)
    vmem_limit = int(min(64 * 2**20, max(32 * 2**20, 2 * vmem_needed)))

    out_shape = (
        jax.ShapeDtypeStruct((B_pad, d_encoded), out_dtype),
        jax.ShapeDtypeStruct((B_pad, d_decoded), out_dtype),
    )
    out_specs = (
        pl.BlockSpec((TB, d_encoded), lambda i: (i, 0), memory_space=pltpu.VMEM),
        pl.BlockSpec((TB, d_decoded), lambda i: (i, 0), memory_space=pltpu.VMEM),
    )

    kernel = functools.partial(_autoenc_fused_kernel, n_enc=n_enc, n_dec=n_dec)
    encoded, decoded = pl.pallas_call(
        kernel,
        out_shape=out_shape,
        grid=(n_tiles,),
        in_specs=in_specs,
        out_specs=out_specs,
        compiler_params=pltpu.CompilerParams(
            # Batch tiles are independent -> shard across v7x's two TCs.
            dimension_semantics=("parallel",),
            vmem_limit_bytes=vmem_limit,
        ),
        cost_estimate=pl.CostEstimate(
            flops=flops,
            transcendentals=transcendentals,
            bytes_accessed=bytes_accessed,
        ),
    )(*operands)

    if B_pad != B:
        encoded = encoded[:B]
        decoded = decoded[:B]
    return encoded, decoded


# ----------------------------- AutoEnc params ------------------------------ #

def init_autoenc_params(key, layer_widths):
    """Deterministic init mirroring torch.nn.Linear shapes.

    Encoder: Linear(w0->w1), Sigmoid, ..., Linear(w_{n-2}->w_{n-1})  (no act on last)
    Decoder: Linear(w_{n-1}->w_{n-2}), Sigmoid, ..., Linear(w1->w0)  (no act on last)
    Weights stored as (in, out) in bfloat16 (halves HBM weight traffic, feeds
    the bf16-native MXU); biases stored as (1, out) in float32.
    """
    enc_dims = list(zip(layer_widths[:-1], layer_widths[1:]))
    dec_dims = list(zip(list(reversed(layer_widths[1:])),
                        list(reversed(layer_widths[:-1]))))

    def make_layers(key, dims):
        layers = []
        for (n_in, n_out) in dims:
            key, kw, kb = jax.random.split(key, 3)
            bound = 1.0 / jnp.sqrt(n_in)
            w = jax.random.uniform(kw, (n_in, n_out), jnp.float32, -bound, bound)
            b = jax.random.uniform(kb, (1, n_out), jnp.float32, -bound, bound)
            layers.append((w.astype(jnp.bfloat16), b))
        return key, layers

    key, enc = make_layers(key, enc_dims)
    key, dec = make_layers(key, dec_dims)
    return {"encoder": enc, "decoder": dec}


# Pure-JAX f32 reference (bf16 weights upcast) for a correctness check.
def _ref_forward(params, x):
    def stack(x, layers):
        n = len(layers)
        for i, (w, b) in enumerate(layers):
            x = x @ w.astype(jnp.float32) + b
            if i < n - 1:
                x = jax.nn.sigmoid(x)
        return x
    enc = stack(x.astype(jnp.float32), params["encoder"])
    dec = stack(enc, params["decoder"])
    return enc, dec


# --------------------------------- main ----------------------------------- #

if __name__ == "__main__":
    layer_widths = [64, 32, 8]   # AutoEnc(layer_widths)
    key = jax.random.PRNGKey(0)
    params = init_autoenc_params(key, layer_widths)

    fwd = jax.jit(autoenc_forward_fused)

    # Exercise: single-tile path (B=8), 2-tile path (B=64), and the padded
    # ragged-batch path (B=20 -> TB=16, padded to 32).
    for batch in (8, 64, 20):
        key, kx = jax.random.split(key)
        x = jax.random.normal(kx, (batch, layer_widths[0]), jnp.float32)

        encoded, decoded = fwd(params, x)
        jax.block_until_ready((encoded, decoded))

        enc_ref, dec_ref = _ref_forward(params, x)
        assert encoded.shape == (batch, layer_widths[-1])
        assert decoded.shape == (batch, layer_widths[0])
        # bf16 matmul operands -> bf16-level tolerance vs the f32 reference.
        assert jnp.allclose(encoded, enc_ref, atol=5e-2, rtol=5e-2), \
            f"encoded mismatch at batch={batch}"
        assert jnp.allclose(decoded, dec_ref, atol=5e-2, rtol=5e-2), \
            f"decoded mismatch at batch={batch}"

    print("KERNEL_OK")
</pallas_src>

<mosaic_0001>
module attributes {stable_mosaic.version = 11 : i64} {
  func.func @_autoenc_fused_kernel(%arg0: i32, %arg1: memref<8x64xf32, #tpu.memory_space<vmem>>, %arg2: memref<64x32xbf16, #tpu.memory_space<vmem>>, %arg3: memref<1x32xf32, #tpu.memory_space<vmem>>, %arg4: memref<32x8xbf16, #tpu.memory_space<vmem>>, %arg5: memref<1x8xf32, #tpu.memory_space<vmem>>, %arg6: memref<8x32xbf16, #tpu.memory_space<vmem>>, %arg7: memref<1x32xf32, #tpu.memory_space<vmem>>, %arg8: memref<32x64xbf16, #tpu.memory_space<vmem>>, %arg9: memref<1x64xf32, #tpu.memory_space<vmem>>, %arg10: memref<8x8xf32, #tpu.memory_space<vmem>>, %arg11: memref<8x64xf32, #tpu.memory_space<vmem>>) attributes {dimension_semantics = [#tpu.dimension_semantics<parallel>], iteration_bounds = array<i64: 1>, scalar_prefetch = 0 : i64, scratch_operands = 0 : i64, tpu.core_type = #tpu.core_type<tc>, window_params = [{transform_indices = @transform_0, window_bounds = array<i64: 8, 64>}, {pipeline_mode = #tpu.pipeline_mode<synchronous>, transform_indices = @transform_1, window_bounds = array<i64: 64, 32>}, {pipeline_mode = #tpu.pipeline_mode<synchronous>, transform_indices = @transform_2, window_bounds = array<i64: 1, 32>}, {pipeline_mode = #tpu.pipeline_mode<synchronous>, transform_indices = @transform_3, window_bounds = array<i64: 32, 8>}, {pipeline_mode = #tpu.pipeline_mode<synchronous>, transform_indices = @transform_4, window_bounds = array<i64: 1, 8>}, {pipeline_mode = #tpu.pipeline_mode<synchronous>, transform_indices = @transform_5, window_bounds = array<i64: 8, 32>}, {pipeline_mode = #tpu.pipeline_mode<synchronous>, transform_indices = @transform_6, window_bounds = array<i64: 1, 32>}, {pipeline_mode = #tpu.pipeline_mode<synchronous>, transform_indices = @transform_7, window_bounds = array<i64: 32, 64>}, {pipeline_mode = #tpu.pipeline_mode<synchronous>, transform_indices = @transform_8, window_bounds = array<i64: 1, 64>}, {transform_indices = @transform_9, window_bounds = array<i64: 8, 8>}, {transform_indices = @transform_10, window_bounds = array<i64: 8, 64>}]} {
    %c0 = arith.constant 0 : index
    %c0_0 = arith.constant 0 : index
    %0 = vector.load %arg1[%c0, %c0_0] : memref<8x64xf32, #tpu.memory_space<vmem>>, vector<8x64xf32>
    %c0_1 = arith.constant 0 : index
    %c0_2 = arith.constant 0 : index
    %1 = vector.load %arg2[%c0_1, %c0_2] : memref<64x32xbf16, #tpu.memory_space<vmem>>, vector<64x32xbf16>
    %c0_3 = arith.constant 0 : index
    %c0_4 = arith.constant 0 : index
    %2 = vector.load %arg3[%c0_3, %c0_4] : memref<1x32xf32, #tpu.memory_space<vmem>>, vector<1x32xf32>
    %3 = arith.truncf %0 : vector<8x64xf32> to vector<8x64xbf16>
    %cst = arith.constant dense<0.000000e+00> : vector<8x32xf32>
    %4 = tpu.matmul %3, %1, %cst {dimension_numbers = #tpu.dot_dimension_numbers<[1], [0], [0], [1], [0, 0, 1, 1], [], []>} : vector<8x64xbf16>, vector<64x32xbf16>, vector<8x32xf32> -> vector<8x32xf32>
    %5 = vector.broadcast %2 : vector<1x32xf32> to vector<8x32xf32>
    %6 = arith.addf %4, %5 : vector<8x32xf32>
    %7 = arith.negf %6 : vector<8x32xf32>
    %8 = math.exp %7 : vector<8x32xf32>
    %cst_5 = arith.constant 1.000000e+00 : f32
    %9 = vector.broadcast %cst_5 : f32 to vector<8x32xf32>
    %10 = arith.addf %9, %8 : vector<8x32xf32>
    %11 = arith.divf %9, %10 : vector<8x32xf32>
    %c0_6 = arith.constant 0 : index
    %c0_7 = arith.constant 0 : index
    %12 = vector.load %arg4[%c0_6, %c0_7] : memref<32x8xbf16, #tpu.memory_space<vmem>>, vector<32x8xbf16>
    %c0_8 = arith.constant 0 : index
    %c0_9 = arith.constant 0 : index
    %13 = vector.load %arg5[%c0_8, %c0_9] : memref<1x8xf32, #tpu.memory_space<vmem>>, vector<1x8xf32>
    %14 = arith.truncf %11 : vector<8x32xf32> to vector<8x32xbf16>
    %cst_10 = arith.constant dense<0.000000e+00> : vector<8x8xf32>
    %15 = tpu.matmul %14, %12, %cst_10 {dimension_numbers = #tpu.dot_dimension_numbers<[1], [0], [0], [1], [0, 0, 1, 1], [], []>} : vector<8x32xbf16>, vector<32x8xbf16>, vector<8x8xf32> -> vector<8x8xf32>
    %16 = vector.broadcast %13 : vector<1x8xf32> to vector<8x8xf32>
    %17 = arith.addf %15, %16 : vector<8x8xf32>
    %c0_11 = arith.constant 0 : index
    %c0_12 = arith.constant 0 : index
    %18 = vector.load %arg10[%c0_11, %c0_12] : memref<8x8xf32, #tpu.memory_space<vmem>>, vector<8x8xf32>
    tpu.vector_store %arg10[%c0_11, %c0_12], %17 {strides = array<i32>} : memref<8x8xf32, #tpu.memory_space<vmem>>, vector<8x8xf32>,
    %c0_13 = arith.constant 0 : index
    %c0_14 = arith.constant 0 : index
    %19 = vector.load %arg6[%c0_13, %c0_14] : memref<8x32xbf16, #tpu.memory_space<vmem>>, vector<8x32xbf16>
    %c0_15 = arith.constant 0 : index
    %c0_16 = arith.constant 0 : index
    %20 = vector.load %arg7[%c0_15, %c0_16] : memref<1x32xf32, #tpu.memory_space<vmem>>, vector<1x32xf32>
    %21 = arith.truncf %17 : vector<8x8xf32> to vector<8x8xbf16>
    %cst_17 = arith.constant dense<0.000000e+00> : vector<8x32xf32>
    %22 = tpu.matmul %21, %19, %cst_17 {dimension_numbers = #tpu.dot_dimension_numbers<[1], [0], [0], [1], [0, 0, 1, 1], [], []>} : vector<8x8xbf16>, vector<8x32xbf16>, vector<8x32xf32> -> vector<8x32xf32>
    %23 = vector.broadcast %20 : vector<1x32xf32> to vector<8x32xf32>
    %24 = arith.addf %22, %23 : vector<8x32xf32>
    %25 = arith.negf %24 : vector<8x32xf32>
    %26 = math.exp %25 : vector<8x32xf32>
    %cst_18 = arith.constant 1.000000e+00 : f32
    %27 = vector.broadcast %cst_18 : f32 to vector<8x32xf32>
    %28 = arith.addf %27, %26 : vector<8x32xf32>
    %29 = arith.divf %27, %28 : vector<8x32xf32>
    %c0_19 = arith.constant 0 : index
    %c0_20 = arith.constant 0 : index
    %30 = vector.load %arg8[%c0_19, %c0_20] : memref<32x64xbf16, #tpu.memory_space<vmem>>, vector<32x64xbf16>
    %c0_21 = arith.constant 0 : index
    %c0_22 = arith.constant 0 : index
    %31 = vector.load %arg9[%c0_21, %c0_22] : memref<1x64xf32, #tpu.memory_space<vmem>>, vector<1x64xf32>
    %32 = arith.truncf %29 : vector<8x32xf32> to vector<8x32xbf16>
    %cst_23 = arith.constant dense<0.000000e+00> : vector<8x64xf32>
    %33 = tpu.matmul %32, %30, %cst_23 {dimension_numbers = #tpu.dot_dimension_numbers<[1], [0], [0], [1], [0, 0, 1, 1], [], []>} : vector<8x32xbf16>, vector<32x64xbf16>, vector<8x64xf32> -> vector<8x64xf32>
    %34 = vector.broadcast %31 : vector<1x64xf32> to vector<8x64xf32>
    %35 = arith.addf %33, %34 : vector<8x64xf32>
    %c0_24 = arith.constant 0 : index
    %c0_25 = arith.constant 0 : index
    %36 = vector.load %arg11[%c0_24, %c0_25] : memref<8x64xf32, #tpu.memory_space<vmem>>, vector<8x64xf32>
    tpu.vector_store %arg11[%c0_24, %c0_25], %35 {strides = array<i32>} : memref<8x64xf32, #tpu.memory_space<vmem>>, vector<8x64xf32>,
    return
  }
  func.func @transform_0(%arg0: i32) -> (i32, i32) {
    %c0_i32 = arith.constant 0 : i32
    %c0_i32_0 = arith.constant 0 : i32
    return %arg0, %c0_i32 : i32, i32
  }
  func.func @transform_1(%arg0: i32) -> (i32, i32) {
    %c0_i32 = arith.constant 0 : i32
    %c0_i32_0 = arith.constant 0 : i32
    %c0_i32_1 = arith.constant 0 : i32
    return %c0_i32, %c0_i32_0 : i32, i32
  }
  func.func @transform_2(%arg0: i32) -> (i32, i32) {
    %c0_i32 = arith.constant 0 : i32
    %c0_i32_0 = arith.constant 0 : i32
    %c0_i32_1 = arith.constant 0 : i32
    return %c0_i32, %c0_i32_0 : i32, i32
  }
  func.func @transform_3(%arg0: i32) -> (i32, i32) {
    %c0_i32 = arith.constant 0 : i32
    %c0_i32_0 = arith.constant 0 : i32
    %c0_i32_1 = arith.constant 0 : i32
    return %c0_i32, %c0_i32_0 : i32, i32
  }
  func.func @transform_4(%arg0: i32) -> (i32, i32) {
    %c0_i32 = arith.constant 0 : i32
    %c0_i32_0 = arith.constant 0 : i32
    %c0_i32_1 = arith.constant 0 : i32
    return %c0_i32, %c0_i32_0 : i32, i32
  }
  func.func @transform_5(%arg0: i32) -> (i32, i32) {
    %c0_i32 = arith.constant 0 : i32
    %c0_i32_0 = arith.constant 0 : i32
    %c0_i32_1 = arith.constant 0 : i32
    return %c0_i32, %c0_i32_0 : i32, i32
  }
  func.func @transform_6(%arg0: i32) -> (i32, i32) {
    %c0_i32 = arith.constant 0 : i32
    %c0_i32_0 = arith.constant 0 : i32
    %c0_i32_1 = arith.constant 0 : i32
    return %c0_i32, %c0_i32_0 : i32, i32
  }
  func.func @transform_7(%arg0: i32) -> (i32, i32) {
    %c0_i32 = arith.constant 0 : i32
    %c0_i32_0 = arith.constant 0 : i32
    %c0_i32_1 = arith.constant 0 : i32
    return %c0_i32, %c0_i32_0 : i32, i32
  }
  func.func @transform_8(%arg0: i32) -> (i32, i32) {
    %c0_i32 = arith.constant 0 : i32
    %c0_i32_0 = arith.constant 0 : i32
    %c0_i32_1 = arith.constant 0 : i32
    return %c0_i32, %c0_i32_0 : i32, i32
  }
  func.func @transform_9(%arg0: i32) -> (i32, i32) {
    %c0_i32 = arith.constant 0 : i32
    %c0_i32_0 = arith.constant 0 : i32
    return %arg0, %c0_i32 : i32, i32
  }
  func.func @transform_10(%arg0: i32) -> (i32, i32) {
    %c0_i32 = arith.constant 0 : i32
    %c0_i32_0 = arith.constant 0 : i32
    return %arg0, %c0_i32 : i32, i32
  }
}

</mosaic_0001>

<llo_original>
// kernel: autoenc_forward_fused.1
$region0: #{autoenc_forward_fused.1}
  #allocation0 [shape = 'u32[]', space=smem, size = 0x4, offset = 0x4, fixed_abs, tag = 'smem constant byte address 0x4 - core index']
  #allocation1 [shape = 'u32[144,128]{1,0:T(1,128)}', space=vmem, size = 0x12000, scoped, tag = 'internal scratch']
  %s0 = inlined_call_operand.vmem [shape: f32[8,64], index: 0, kind: input, shape index: {}]
  %s1 = inlined_call_operand.vmem [shape: bf16[64,32], index: 1, kind: input, shape index: {}]
  %s2 = inlined_call_operand.vmem [shape: f32[1,32], index: 2, kind: input, shape index: {}]
  %s3 = inlined_call_operand.vmem [shape: bf16[32,8], index: 3, kind: input, shape index: {}]
  %s4 = inlined_call_operand.vmem [shape: f32[1,8], index: 4, kind: input, shape index: {}]
  %s5 = inlined_call_operand.vmem [shape: bf16[8,32], index: 5, kind: input, shape index: {}]
  %s6 = inlined_call_operand.vmem [shape: f32[1,32], index: 6, kind: input, shape index: {}]
  %s7 = inlined_call_operand.vmem [shape: bf16[32,64], index: 7, kind: input, shape index: {}]
  %s8 = inlined_call_operand.vmem [shape: f32[1,64], index: 8, kind: input, shape index: {}]
  %s9 = inlined_call_operand.hbm [shape: f32[8,8], index: 9, kind: output, shape index: {0}]
  %s10 = inlined_call_operand.hbm [shape: f32[8,64], index: 10, kind: output, shape index: {1}]
  %11 = xla_tuple %s9, %s10
  %s12 = sld [smem:[#allocation0]]
  $region54: #{autoenc_forward_fused.1} parent=0
    _
  %s14 = ssub.s32 1, %s12
  %s15 = scalar_select 0, %s14, %s12
  $region1: #{autoenc_forward_fused.1} parent=0
    #allocation2 [shape = 'u8[4096]{0}', space=vmem, size = 0x1000, scoped, tag = 'output window, operand 0, single buffered']
    #allocation3 [shape = 's32[1]{0}', space=sflag, size = 0x4, scoped, tag = 'scoped memory for autoenc_forward_fused.1']
    #allocation4 [shape = 'u8[4096]{0}', space=vmem, size = 0x1000, scoped, tag = 'output window, operand 1, single buffered']
    #allocation5 [shape = 's32[1]{0}', space=sflag, size = 0x4, scoped, tag = 'scoped memory for autoenc_forward_fused.1']
    %16 = vsyncpa [#allocation3], 0
    %17 = vsyncpa [#allocation5], 0
    // Predicated region
    $region2: #{autoenc_forward_fused.1} parent=1 // pred_check
      _
    $region3: #{autoenc_forward_fused.1} parent=1 // pred_check_branch
      %19 = sbr.rel (0) target = $region5
    $region4: #{autoenc_forward_fused.1} parent=1 // pred_region
      _
    $region5: #{autoenc_forward_fused.1} parent=1 // pred_fallthru
      _
    // Predicated region
    $region6: #{autoenc_forward_fused.1} parent=1 // pred_check
      _
    $region7: #{autoenc_forward_fused.1} parent=1 // pred_check_branch
      %21 = sbr.rel (0) target = $region9
    $region8: #{autoenc_forward_fused.1} parent=1 // pred_region
      _
    $region9: #{autoenc_forward_fused.1} parent=1 // pred_fallthru
      _
    // Predicated region
    $region10: #{autoenc_forward_fused.1} parent=1 // pred_check
      _
    $region11: #{autoenc_forward_fused.1} parent=1 // pred_check_branch
      %23 = sbr.rel (0) target = $region13
    $region12: #{autoenc_forward_fused.1} parent=1 // pred_region
      _
    $region13: #{autoenc_forward_fused.1} parent=1 // pred_fallthru
      _
    // Predicated region
    $region14: #{autoenc_forward_fused.1} parent=1 // pred_check
      _
    $region15: #{autoenc_forward_fused.1} parent=1 // pred_check_branch
      %25 = sbr.rel (0) target = $region17
    $region16: #{autoenc_forward_fused.1} parent=1 // pred_region
      _
    $region17: #{autoenc_forward_fused.1} parent=1 // pred_fallthru
      _
    // Predicated region
    $region18: #{autoenc_forward_fused.1} parent=1 // pred_check
      _
    $region19: #{autoenc_forward_fused.1} parent=1 // pred_check_branch
      %27 = sbr.rel (0) target = $region21
    $region20: #{autoenc_forward_fused.1} parent=1 // pred_region
      _
    $region21: #{autoenc_forward_fused.1} parent=1 // pred_fallthru
      _
    // Predicated region
    $region22: #{autoenc_forward_fused.1} parent=1 // pred_check
      _
    $region23: #{autoenc_forward_fused.1} parent=1 // pred_check_branch
      %29 = sbr.rel (0) target = $region25
    $region24: #{autoenc_forward_fused.1} parent=1 // pred_region
      _
    $region25: #{autoenc_forward_fused.1} parent=1 // pred_fallthru
      _
    // Predicated region
    $region26: #{autoenc_forward_fused.1} parent=1 // pred_check
      _
    $region27: #{autoenc_forward_fused.1} parent=1 // pred_check_branch
      %31 = sbr.rel (0) target = $region29
    $region28: #{autoenc_forward_fused.1} parent=1 // pred_region
      _
    $region29: #{autoenc_forward_fused.1} parent=1 // pred_fallthru
      _
    // Predicated region
    $region30: #{autoenc_forward_fused.1} parent=1 // pred_check
      _
    $region31: #{autoenc_forward_fused.1} parent=1 // pred_check_branch
      %33 = sbr.rel (0) target = $region33
    $region32: #{autoenc_forward_fused.1} parent=1 // pred_region
      _
    $region33: #{autoenc_forward_fused.1} parent=1 // pred_fallthru
      _
    // Predicated region
    $region34: #{autoenc_forward_fused.1} parent=1 // pred_check
      _
    $region35: #{autoenc_forward_fused.1} parent=1 // pred_check_branch
      %35 = sbr.rel (0) target = $region37
    $region36: #{autoenc_forward_fused.1} parent=1 // pred_region
      _
    $region37: #{autoenc_forward_fused.1} parent=1 // pred_fallthru
      _
    %v37 = vld [vmem:[%s0] sm:$0xff]
    %v38 = vld [vmem:[%s1] sm:$0xf]
    %v39 = vld [vmem:[%s1 + $0x4] sm:$0xf]
    %v40 = vld [vmem:[%s1 + $0x8] sm:$0xf]
    %v41 = vld [vmem:[%s1 + $0xc] sm:$0xf]
    %v42 = vld [vmem:[%s1 + $0x10] sm:$0xf]
    %v43 = vld [vmem:[%s1 + $0x14] sm:$0xf]
    %v44 = vld [vmem:[%s1 + $0x18] sm:$0xf]
    %v45 = vld [vmem:[%s1 + $0x1c] sm:$0xf]
    %v46 = vld [vmem:[%s2] sm:$0x1]
    %v47 = vpack.c.bf16 %v37, %v37
    %v49 = vlaneseq
    %v50 = vshrl.u32 %v49, 7
    %v51 = vsub.s32 0, %v50
    %v52 = vrot.slane %v46, %v51
    %v62 = vunpack.c.l.b16 %v38
    %v63 = vunpack.c.l.b16 %v39
    %v64 = vunpack.c.l.b16 %v40
    %v65 = vunpack.c.l.b16 %v41
    %v66 = vunpack.c.l.b16 %v42
    %v67 = vunpack.c.l.b16 %v43
    %v68 = vunpack.c.l.b16 %v44
    %v69 = vunpack.c.l.b16 %v45
    %v70 = vpack.c.b16 %v63, %v62
    %v71 = vpack.c.b16 %v65, %v64
    %v72 = vpack.c.b16 %v67, %v66
    %v73 = vpack.c.b16 %v69, %v68
    %vm78 = vcmask 523264
    %v80 = vsel %vm78, %v47, 0
    %82 = vmatprep.subr.bf16.mxu0 0
    %83 = vmatpush1.bf16.msra.mxu0 0
    %84 = vmatprep.subr.bf16.mxu0 0
    %85 = vmatpush1.bf16.msra.mxu0 0
    %86 = vmatprep.subr.bf16.mxu0 0
    %87 = vmatpush1.bf16.msra.mxu0 0
    %88 = vmatprep.subr.bf16.mxu0 0
    %89 = vmatpush1.bf16.msra.mxu0 0
    %90 = vmatprep.subr.bf16.mxu0 0
    %91 = vmatpush1.bf16.msra.mxu0 %v73
    %92 = vmatprep.subr.bf16.mxu0 0
    %93 = vmatpush1.bf16.msra.mxu0 %v72
    %94 = vmatprep.subr.bf16.mxu0 0
    %95 = vmatpush1.bf16.msra.mxu0 %v71
    %96 = vmatprep.subr.bf16.mxu0 0
    %97 = vmatpush1.bf16.msra.mxu0 %v70
    %98 = vmatprep.subr.bf16.mxu0 0
    %99 = vmatpush2.bf16.msra.mxu0 0
    %100 = vmatprep.subr.bf16.mxu0 0
    %101 = vmatpush2.bf16.msra.mxu0 0
    %102 = vmatprep.subr.bf16.mxu0 0
    %103 = vmatpush2.bf16.msra.mxu0 0
    %104 = vmatprep.subr.bf16.mxu0 0
    %105 = vmatpush2.bf16.msra.mxu0 0
    %106 = vmatprep.subr.bf16.mxu0 0
    %107 = vmatpush2.bf16.msra.mxu0 0
    %108 = vmatprep.subr.bf16.mxu0 0
    %109 = vmatpush2.bf16.msra.mxu0 0
    %110 = vmatprep.subr.bf16.mxu0 0
    %111 = vmatpush2.bf16.msra.mxu0 0
    %112 = vmatprep.subr.bf16.mxu0 0
    %113 = vmatpush2.bf16.msra.mxu0 0
    %114 = vmatprep.mubr.bf16.mxu0 0
    %115 = vmatmul.mubr.bf16.gmra.mxu0 %v80
    %v116 = vpop.f32.mrf.mxu0
    %v117 = vadd.f32 %v52, %v116
    %v118 = vpop.f32.mrf.mxu0
    %v119 = vpop.f32.mrf.mxu0
    %v120 = vpop.f32.mrf.mxu0
    %121 = vdwg.mxu0
    %v122 = vxor.u32 %v117, 2147483648
    %v123 = vmul.f32 %v122, 1.442695
    %v124 = vpow.pop %v123
    %v125 = vadd.f32 %v124, 1.0
    %v126 = vrcp.pop %v125
    %v127 = vmul.f32 1.0, %v126
    %v128 = vld [vmem:[%s3] sm:$0xf]
    %v129 = vld [vmem:[%s3 + $0x4] sm:$0xf]
    %v130 = vld [vmem:[%s3 + $0x8] sm:$0xf]
    %v131 = vld [vmem:[%s3 + $0xc] sm:$0xf]
    %v132 = vld [vmem:[%s4] sm:$0x1]
    %v133 = vpack.c.bf16 %v127, %v127
    %v135 = vlaneseq
    %v136 = vshrl.u32 %v135, 7
    %v137 = vsub.s32 0, %v136
    %v138 = vrot.slane %v132, %v137
    %v144 = vunpack.c.l.b16 %v128
    %v145 = vunpack.c.l.b16 %v129
    %v146 = vunpack.c.l.b16 %v130
    %v147 = vunpack.c.l.b16 %v131
    %v148 = vpack.c.b16 %v145, %v144
    %v149 = vpack.c.b16 %v147, %v146
    %vm152 = vcmask 261120
    %v154 = vsel %vm152, %v133, 0
    %156 = vmatprep.subr.bf16.mxu0 0
    %157 = vmatpush1.bf16.msra.mxu0 0
    %158 = vmatprep.subr.bf16.mxu0 0
    %159 = vmatpush1.bf16.msra.mxu0 0
    %160 = vmatprep.subr.bf16.mxu0 0
    %161 = vmatpush1.bf16.msra.mxu0 0
    %162 = vmatprep.subr.bf16.mxu0 0
    %163 = vmatpush1.bf16.msra.mxu0 0
    %164 = vmatprep.subr.bf16.mxu0 0
    %165 = vmatpush1.bf16.msra.mxu0 0
    %166 = vmatprep.subr.bf16.mxu0 0
    %167 = vmatpush1.bf16.msra.mxu0 0
    %168 = vmatprep.subr.bf16.mxu0 0
    %169 = vmatpush1.bf16.msra.mxu0 %v149
    %170 = vmatprep.subr.bf16.mxu0 0
    %171 = vmatpush1.bf16.msra.mxu0 %v148
    %172 = vmatprep.subr.bf16.mxu0 0
    %173 = vmatpush2.bf16.msra.mxu0 0
    %174 = vmatprep.subr.bf16.mxu0 0
    %175 = vmatpush2.bf16.msra.mxu0 0
    %176 = vmatprep.subr.bf16.mxu0 0
    %177 = vmatpush2.bf16.msra.mxu0 0
    %178 = vmatprep.subr.bf16.mxu0 0
    %179 = vmatpush2.bf16.msra.mxu0 0
    %180 = vmatprep.subr.bf16.mxu0 0
    %181 = vmatpush2.bf16.msra.mxu0 0
    %182 = vmatprep.subr.bf16.mxu0 0
    %183 = vmatpush2.bf16.msra.mxu0 0
    %184 = vmatprep.subr.bf16.mxu0 0
    %185 = vmatpush2.bf16.msra.mxu0 0
    %186 = vmatprep.subr.bf16.mxu0 0
    %187 = vmatpush2.bf16.msra.mxu0 0
    %188 = vmatprep.mubr.bf16.mxu0 0
    %189 = vmatmul.mubr.bf16.gmra.mxu0 %v154
    %v190 = vpop.f32.mrf.mxu0
    %v191 = vadd.f32 %v138, %v190
    %v192 = vpop.f32.mrf.mxu0
    %v193 = vpop.f32.mrf.mxu0
    %v194 = vpop.f32.mrf.mxu0
    %195 = vdwg.mxu0
    %vm196 = vcmask 64512
    %197 = vst.msk [vmem:[#allocation2] sm:$0xff] %vm196, %v191
    %v198 = vld [vmem:[%s5] sm:$0xf]
    %v199 = vld [vmem:[%s6] sm:$0x1]
    %v200 = vpack.c.bf16 %v191, %v191
    %v202 = vlaneseq
    %v203 = vshrl.u32 %v202, 7
    %v204 = vsub.s32 0, %v203
    %v205 = vrot.slane %v199, %v204
    %v208 = vsel %vm196, %v200, 0
    %vm210 = vcmask 1043456
    %v212 = vsel %vm210, %v198, 0
    %214 = vmatprep.subr.bf16.mxu0 0
    %215 = vmatpush1.bf16.msra.mxu0 0
    %216 = vmatprep.subr.bf16.mxu0 0
    %217 = vmatpush1.bf16.msra.mxu0 0
    %218 = vmatprep.subr.bf16.mxu0 0
    %219 = vmatpush1.bf16.msra.mxu0 0
    %220 = vmatprep.subr.bf16.mxu0 0
    %221 = vmatpush1.bf16.msra.mxu0 0
    %222 = vmatprep.subr.bf16.mxu0 0
    %223 = vmatpush1.bf16.msra.mxu0 0
    %224 = vmatprep.subr.bf16.mxu0 0
    %225 = vmatpush1.bf16.msra.mxu0 0
    %226 = vmatprep.subr.bf16.mxu0 0
    %227 = vmatpush1.bf16.msra.mxu0 0
    %228 = vmatprep.subr.bf16.mxu0 0
    %229 = vmatpush1.bf16.msra.mxu0 %v212
    %230 = vmatprep.subr.bf16.mxu0 0
    %231 = vmatpush2.bf16.msra.mxu0 0
    %232 = vmatprep.subr.bf16.mxu0 0
    %233 = vmatpush2.bf16.msra.mxu0 0
    %234 = vmatprep.subr.bf16.mxu0 0
    %235 = vmatpush2.bf16.msra.mxu0 0
    %236 = vmatprep.subr.bf16.mxu0 0
    %237 = vmatpush2.bf16.msra.mxu0 0
    %238 = vmatprep.subr.bf16.mxu0 0
    %239 = vmatpush2.bf16.msra.mxu0 0
    %240 = vmatprep.subr.bf16.mxu0 0
    %241 = vmatpush2.bf16.msra.mxu0 0
    %242 = vmatprep.subr.bf16.mxu0 0
    %243 = vmatpush2.bf16.msra.mxu0 0
    %244 = vmatprep.subr.bf16.mxu0 0
    %245 = vmatpush2.bf16.msra.mxu0 0
    %246 = vmatprep.mubr.bf16.mxu0 0
    %247 = vmatmul.mubr.bf16.gmra.mxu0 %v208
    %v248 = vpop.f32.mrf.mxu0
    %v249 = vadd.f32 %v205, %v248
    %v250 = vpop.f32.mrf.mxu0
    %v251 = vpop.f32.mrf.mxu0
    %v252 = vpop.f32.mrf.mxu0
    %253 = vdwg.mxu0
    %v254 = vxor.u32 %v249, 2147483648
    %v255 = vmul.f32 %v254, 1.442695
    %v256 = vpow.pop %v255
    %v257 = vadd.f32 %v256, 1.0
    %v258 = vrcp.pop %v257
    %v259 = vmul.f32 1.0, %v258
    %v260 = vld [vmem:[%s7] sm:$0xf]
    %v261 = vld [vmem:[%s7 + $0x4] sm:$0xf]
    %v262 = vld [vmem:[%s7 + $0x8] sm:$0xf]
    %v263 = vld [vmem:[%s7 + $0xc] sm:$0xf]
    %v264 = vld [vmem:[%s8] sm:$0x1]
    %v265 = vpack.c.bf16 %v259, %v259
    %v267 = vlaneseq
    %v268 = vshrl.u32 %v267, 7
    %v269 = vsub.s32 0, %v268
    %v270 = vrot.slane %v264, %v269
    %v276 = vunpack.c.l.b16 %v260
    %v277 = vunpack.c.l.b16 %v261
    %v278 = vunpack.c.l.b16 %v262
    %v279 = vunpack.c.l.b16 %v263
    %v280 = vpack.c.b16 %v277, %v276
    %v281 = vpack.c.b16 %v279, %v278
    %v285 = vsel %vm152, %v265, 0
    %287 = vmatprep.subr.bf16.mxu0 0
    %288 = vmatpush1.bf16.msra.mxu0 0
    %289 = vmatprep.subr.bf16.mxu0 0
    %290 = vmatpush1.bf16.msra.mxu0 0
    %291 = vmatprep.subr.bf16.mxu0 0
    %292 = vmatpush1.bf16.msra.mxu0 0
    %293 = vmatprep.subr.bf16.mxu0 0
    %294 = vmatpush1.bf16.msra.mxu0 0
    %295 = vmatprep.subr.bf16.mxu0 0
    %296 = vmatpush1.bf16.msra.mxu0 0
    %297 = vmatprep.subr.bf16.mxu0 0
    %298 = vmatpush1.bf16.msra.mxu0 0
    %299 = vmatprep.subr.bf16.mxu0 0
    %300 = vmatpush1.bf16.msra.mxu0 %v281
    %301 = vmatprep.subr.bf16.mxu0 0
    %302 = vmatpush1.bf16.msra.mxu0 %v280
    %303 = vmatprep.subr.bf16.mxu0 0
    %304 = vmatpush2.bf16.msra.mxu0 0
    %305 = vmatprep.subr.bf16.mxu0 0
    %306 = vmatpush2.bf16.msra.mxu0 0
    %307 = vmatprep.subr.bf16.mxu0 0
    %308 = vmatpush2.bf16.msra.mxu0 0
    %309 = vmatprep.subr.bf16.mxu0 0
    %310 = vmatpush2.bf16.msra.mxu0 0
    %311 = vmatprep.subr.bf16.mxu0 0
    %312 = vmatpush2.bf16.msra.mxu0 0
    %313 = vmatprep.subr.bf16.mxu0 0
    %314 = vmatpush2.bf16.msra.mxu0 0
    %315 = vmatprep.subr.bf16.mxu0 0
    %316 = vmatpush2.bf16.msra.mxu0 0
    %317 = vmatprep.subr.bf16.mxu0 0
    %318 = vmatpush2.bf16.msra.mxu0 0
    %319 = vmatprep.mubr.bf16.mxu0 0
    %320 = vmatmul.mubr.bf16.gmra.mxu0 %v285
    %v321 = vpop.f32.mrf.mxu0
    %v322 = vadd.f32 %v270, %v321
    %v323 = vpop.f32.mrf.mxu0
    %v324 = vpop.f32.mrf.mxu0
    %v325 = vpop.f32.mrf.mxu0
    %326 = vdwg.mxu0
    %327 = vst.msk [vmem:[#allocation4] sm:$0xff] %vm78, %v322
    // Predicated region
    $region38: #{autoenc_forward_fused.1} parent=1 // pred_check
      _
    $region39: #{autoenc_forward_fused.1} parent=1 // pred_check_branch
      %329 = sbr.rel (0) target = $region41
    $region40: #{autoenc_forward_fused.1} parent=1 // pred_region
      %s331 = ssub.s32 128, 128
      %332 = vsyncadd [#allocation3], %s331
      %s334 = sshll.u32 [#allocation2], 4
      %s335 = int_to_ptr.vmem [resolvable:$true] %s334
      %337 = dma.vmem_to_hbm [thread:$0]  %s335, 128, %s9, [#allocation3]
    $region41: #{autoenc_forward_fused.1} parent=1 // pred_fallthru
      _
    // Predicated region
    $region42: #{autoenc_forward_fused.1} parent=1 // pred_check
      _
    $region43: #{autoenc_forward_fused.1} parent=1 // pred_check_branch
      %339 = sbr.rel (0) target = $region45
    $region44: #{autoenc_forward_fused.1} parent=1 // pred_region
      %s341 = ssub.s32 128, 128
      %342 = vsyncadd [#allocation5], %s341
      %s344 = sshll.u32 [#allocation4], 4
      %s345 = int_to_ptr.vmem [resolvable:$true] %s344
      %347 = dma.vmem_to_hbm [thread:$0]  %s345, 128, %s10, [#allocation5]
    $region45: #{autoenc_forward_fused.1} parent=1 // pred_fallthru
      _
    // Predicated region
    $region46: #{autoenc_forward_fused.1} parent=1 // pred_check
      _
    $region47: #{autoenc_forward_fused.1} parent=1 // pred_check_branch
      %349 = sbr.rel (0) target = $region49
    $region48: #{autoenc_forward_fused.1} parent=1 // pred_region
      %350 = dma.done [#allocation3], 128
    $region49: #{autoenc_forward_fused.1} parent=1 // pred_fallthru
      _
    // Predicated region
    $region50: #{autoenc_forward_fused.1} parent=1 // pred_check
      _
    $region51: #{autoenc_forward_fused.1} parent=1 // pred_check_branch
      %352 = sbr.rel (0) target = $region53
    $region52: #{autoenc_forward_fused.1} parent=1 // pred_region
      %353 = dma.done [#allocation5], 128
    $region53: #{autoenc_forward_fused.1} parent=1 // pred_fallthru
      _
    %354 = vsyncpa [#allocation3], 1
    %355 = vsyncpa [#allocation5], 1

</llo_original>
